<compile_context>
chip_gen: v5e
topology: v5e:2x2
jax: 0.10.0
libtpu: 0.0.40
codegen_flags: <defaults>
</compile_context>

<pallas_src>
import functools

import jax
import jax.numpy as jnp
from jax import lax
from jax.experimental import pallas as pl
from jax.experimental.pallas import tpu as pltpu

# ---- module configuration (mirrors RGCNLayer.__init__) -----------------------
IN_FEAT = 32
OUT_FEAT = 32
NUM_REL = 4                          # "num_edges" ctor arg == number of relation types
NUM_BASES = 4
SUBMAT_IN = IN_FEAT // NUM_BASES     # 8
SUBMAT_OUT = OUT_FEAT // NUM_BASES   # 8
LANES = 128                          # lane-dense output width


def _rgcn_kernel(src_ref,                    # SMEM (E,) int32
                 hn_ref, et_ref, dst_ref, norm_ref, bd_ref, lw_ref,
                 out_ref,                    # VMEM (N, 128) f32
                 hsrc_ref,                   # VMEM scratch (E, F_in) f32
                 *, n_nodes, n_edges, n_rel):
    f32 = jnp.float32

    # Exact gather of source-node rows: indices from SMEM, dynamic sublane loads.
    def gather_row(e, carry):
        hsrc_ref[pl.ds(e, 1), :] = hn_ref[pl.ds(src_ref[e], 1), :]
        return carry
    lax.fori_loop(0, n_edges, gather_row, 0, unroll=True)

    h_src = hsrc_ref[...]                    # (E, F_in)
    et = et_ref[...]                         # (E, 1) int32

    # msg_func: per-relation dense block-diagonal matmul (full 128-lane MXU dots)
    # followed by a per-edge relation select.  bd_ref[r] is the block-diagonal
    # expansion of weight[r] padded to 128 output lanes (lanes >= OUT_FEAT are 0).
    msg = jnp.zeros((n_edges, LANES), f32)
    for r in range(n_rel):
        part = jnp.dot(h_src, bd_ref[r], preferred_element_type=f32)   # (E, 128)
        msg = msg + (et == r).astype(f32) * part

    # fn.sum reduction onto destination nodes (one-hot scatter on the MXU).
    s_oh = (lax.broadcasted_iota(jnp.int32, (n_nodes, n_edges), 0)
            == dst_ref[...]).astype(f32)                               # (N, E)
    agg = jnp.dot(s_oh, msg, preferred_element_type=f32)               # (N, 128)

    # apply_func (h * norm) + self-loop message + activation.
    # (bias=None and dropout=0.0 -> those branches are inactive.)
    node = agg * norm_ref[...] + jnp.dot(hn_ref[...], lw_ref[...],
                                         preferred_element_type=f32)
    out_ref[...] = jnp.tanh(node)


def rgcn_forward(h_nodes, src, dst, etype, norm, weight, loop_w):
    n_nodes, in_feat = h_nodes.shape
    n_edges = int(src.shape[0])
    n_rel = int(weight.shape[0])
    assert in_feat == IN_FEAT
    assert IN_FEAT % NUM_BASES == 0 and OUT_FEAT % NUM_BASES == 0
    assert weight.shape[1] == NUM_BASES * SUBMAT_IN * SUBMAT_OUT

    # --- parameter re-layout (layout plumbing, done once per call) -----------
    # Block-diagonal expansion of the per-relation weights, padded to 128 lanes:
    #   bd[r, b*si+j, b*so+o] = weight[r].reshape(nb, si, so)[b, j, o]
    w4 = weight.astype(jnp.float32).reshape(n_rel, NUM_BASES, SUBMAT_IN, SUBMAT_OUT)
    bd = jnp.zeros((n_rel, IN_FEAT, LANES), jnp.float32)
    for b in range(NUM_BASES):
        bd = bd.at[:, b * SUBMAT_IN:(b + 1) * SUBMAT_IN,
                   b * SUBMAT_OUT:(b + 1) * SUBMAT_OUT].set(w4[:, b])
    lw_pad = jnp.zeros((IN_FEAT, LANES), jnp.float32).at[:, :OUT_FEAT].set(
        loop_w.astype(jnp.float32))

    kernel = functools.partial(_rgcn_kernel, n_nodes=n_nodes, n_edges=n_edges,
                               n_rel=n_rel)

    vmem = pl.BlockSpec(memory_space=pltpu.MemorySpace.VMEM)
    smem = pl.BlockSpec(memory_space=pltpu.MemorySpace.SMEM)

    flops = int(2 * n_edges * IN_FEAT * LANES * n_rel   # per-relation message dots
                + 2 * n_nodes * n_edges * LANES         # scatter-sum
                + 2 * n_nodes * IN_FEAT * LANES)        # self-loop
    bytes_accessed = int(4 * (n_nodes * IN_FEAT + 3 * n_edges + n_nodes
                              + n_rel * IN_FEAT * LANES + IN_FEAT * LANES
                              + n_nodes * LANES))

    node_pad = pl.pallas_call(
        kernel,
        out_shape=jax.ShapeDtypeStruct((n_nodes, LANES), jnp.float32),
        in_specs=[smem, vmem, vmem, vmem, vmem, vmem, vmem],
        out_specs=vmem,
        scratch_shapes=[pltpu.VMEM((n_edges, IN_FEAT), jnp.float32)],
        cost_estimate=pl.CostEstimate(flops=flops,
                                      transcendentals=n_nodes * LANES,
                                      bytes_accessed=bytes_accessed),
    )(src.astype(jnp.int32),
      h_nodes.astype(jnp.float32),
      etype.astype(jnp.int32).reshape(n_edges, 1),
      dst.astype(jnp.int32).reshape(1, n_edges),
      norm.astype(jnp.float32).reshape(n_nodes, 1),
      bd, lw_pad)

    return node_pad[:, :OUT_FEAT]            # lane-dense store, slice outside


# ---- pure-JAX reference (mirrors the PyTorch msg_func/apply_func/forward) ----
def rgcn_forward_ref(h_nodes, src, dst, etype, norm, weight, loop_w):
    n_nodes = h_nodes.shape[0]
    n_edges = src.shape[0]
    w = weight[etype].reshape(n_edges, NUM_BASES, SUBMAT_IN, SUBMAT_OUT)
    node = h_nodes[src].reshape(n_edges, NUM_BASES, SUBMAT_IN)
    msg = jnp.einsum('ebj,ebjo->ebo', node, w).reshape(n_edges, OUT_FEAT)
    agg = jnp.zeros((n_nodes, OUT_FEAT), jnp.float32).at[dst].add(msg)
    h = agg * norm
    h = h + h_nodes @ loop_w
    return jnp.tanh(h)


if __name__ == "__main__":
    key = jax.random.PRNGKey(0)
    N, E = 16, 24
    ks = jax.random.split(key, 6)

    def xavier(k, shape):
        # torch.nn.init.xavier_normal_ with gain = calculate_gain('relu') = sqrt(2)
        fan_out, fan_in = shape[0], shape[-1]
        std = (2.0 ** 0.5) * (2.0 / (fan_in + fan_out)) ** 0.5
        return std * jax.random.normal(k, shape, jnp.float32)

    weight = xavier(ks[0], (NUM_REL, NUM_BASES * SUBMAT_IN * SUBMAT_OUT))
    loop_w = xavier(ks[1], (IN_FEAT, OUT_FEAT))

    h_nodes = jax.random.normal(ks[2], (N, IN_FEAT), jnp.float32)     # g.ndata['h']
    src = jax.random.randint(ks[3], (E,), 0, N)
    dst = jax.random.randint(ks[4], (E,), 0, N)
    etype = jax.random.randint(ks[5], (E,), 0, NUM_REL)               # g.edata['type']

    deg = jnp.zeros((N,), jnp.float32).at[dst].add(1.0)
    norm = (1.0 / jnp.maximum(deg, 1.0)).reshape(N, 1)                # g.ndata['norm']

    node_out = rgcn_forward(h_nodes, src, dst, etype, norm, weight, loop_w)
    jax.block_until_ready(node_out)

    node_ref = rgcn_forward_ref(h_nodes, src, dst, etype, norm, weight, loop_w)
    assert node_out.shape == (N, OUT_FEAT)
    assert jnp.allclose(node_out, node_ref, atol=1e-3, rtol=1e-3), "node_repr mismatch"

    print("KERNEL_OK")
</pallas_src>

<mosaic_0001>
module attributes {stable_mosaic.version = 11 : i64} {
  func.func @_rgcn_kernel(%arg0: memref<24xi32, #tpu.memory_space<smem>>, %arg1: memref<16x32xf32, #tpu.memory_space<vmem>>, %arg2: memref<24x1xi32, #tpu.memory_space<vmem>>, %arg3: memref<1x24xi32, #tpu.memory_space<vmem>>, %arg4: memref<16x1xf32, #tpu.memory_space<vmem>>, %arg5: memref<4x32x128xf32, #tpu.memory_space<vmem>>, %arg6: memref<32x128xf32, #tpu.memory_space<vmem>>, %arg7: memref<16x128xf32, #tpu.memory_space<vmem>>, %arg8: memref<24x32xf32, #tpu.memory_space<vmem>>) attributes {dimension_semantics = [], scalar_prefetch = 0 : i64, scratch_operands = 1 : i64, tpu.core_type = #tpu.core_type<tc>} {
    %c0_i32 = arith.constant 0 : i32
    %0 = arith.index_cast %c0_i32 : i32 to index
    %1 = memref.load %arg0[%0] : memref<24xi32, #tpu.memory_space<smem>>
    %2 = arith.index_cast %1 : i32 to index
    %c0 = arith.constant 0 : index
    %3 = vector.load %arg1[%2, %c0] : memref<16x32xf32, #tpu.memory_space<vmem>>, vector<1x32xf32>
    %4 = arith.index_cast %c0_i32 : i32 to index
    %c0_0 = arith.constant 0 : index
    %5 = vector.load %arg8[%4, %c0_0] : memref<24x32xf32, #tpu.memory_space<vmem>>, vector<1x32xf32>
    tpu.vector_store %arg8[%4, %c0_0], %3 {strides = array<i32>} : memref<24x32xf32, #tpu.memory_space<vmem>>, vector<1x32xf32>,
    %c1_i32 = arith.constant 1 : i32
    %6 = arith.index_cast %c1_i32 : i32 to index
    %7 = memref.load %arg0[%6] : memref<24xi32, #tpu.memory_space<smem>>
    %8 = arith.index_cast %7 : i32 to index
    %c0_1 = arith.constant 0 : index
    %9 = vector.load %arg1[%8, %c0_1] : memref<16x32xf32, #tpu.memory_space<vmem>>, vector<1x32xf32>
    %10 = arith.index_cast %c1_i32 : i32 to index
    %c0_2 = arith.constant 0 : index
    %11 = vector.load %arg8[%10, %c0_2] : memref<24x32xf32, #tpu.memory_space<vmem>>, vector<1x32xf32>
    tpu.vector_store %arg8[%10, %c0_2], %9 {strides = array<i32>} : memref<24x32xf32, #tpu.memory_space<vmem>>, vector<1x32xf32>,
    %c2_i32 = arith.constant 2 : i32
    %12 = arith.index_cast %c2_i32 : i32 to index
    %13 = memref.load %arg0[%12] : memref<24xi32, #tpu.memory_space<smem>>
    %14 = arith.index_cast %13 : i32 to index
    %c0_3 = arith.constant 0 : index
    %15 = vector.load %arg1[%14, %c0_3] : memref<16x32xf32, #tpu.memory_space<vmem>>, vector<1x32xf32>
    %16 = arith.index_cast %c2_i32 : i32 to index
    %c0_4 = arith.constant 0 : index
    %17 = vector.load %arg8[%16, %c0_4] : memref<24x32xf32, #tpu.memory_space<vmem>>, vector<1x32xf32>
    tpu.vector_store %arg8[%16, %c0_4], %15 {strides = array<i32>} : memref<24x32xf32, #tpu.memory_space<vmem>>, vector<1x32xf32>,
    %c3_i32 = arith.constant 3 : i32
    %18 = arith.index_cast %c3_i32 : i32 to index
    %19 = memref.load %arg0[%18] : memref<24xi32, #tpu.memory_space<smem>>
    %20 = arith.index_cast %19 : i32 to index
    %c0_5 = arith.constant 0 : index
    %21 = vector.load %arg1[%20, %c0_5] : memref<16x32xf32, #tpu.memory_space<vmem>>, vector<1x32xf32>
    %22 = arith.index_cast %c3_i32 : i32 to index
    %c0_6 = arith.constant 0 : index
    %23 = vector.load %arg8[%22, %c0_6] : memref<24x32xf32, #tpu.memory_space<vmem>>, vector<1x32xf32>
    tpu.vector_store %arg8[%22, %c0_6], %21 {strides = array<i32>} : memref<24x32xf32, #tpu.memory_space<vmem>>, vector<1x32xf32>,
    %c4_i32 = arith.constant 4 : i32
    %24 = arith.index_cast %c4_i32 : i32 to index
    %25 = memref.load %arg0[%24] : memref<24xi32, #tpu.memory_space<smem>>
    %26 = arith.index_cast %25 : i32 to index
    %c0_7 = arith.constant 0 : index
    %27 = vector.load %arg1[%26, %c0_7] : memref<16x32xf32, #tpu.memory_space<vmem>>, vector<1x32xf32>
    %28 = arith.index_cast %c4_i32 : i32 to index
    %c0_8 = arith.constant 0 : index
    %29 = vector.load %arg8[%28, %c0_8] : memref<24x32xf32, #tpu.memory_space<vmem>>, vector<1x32xf32>
    tpu.vector_store %arg8[%28, %c0_8], %27 {strides = array<i32>} : memref<24x32xf32, #tpu.memory_space<vmem>>, vector<1x32xf32>,
    %c5_i32 = arith.constant 5 : i32
    %30 = arith.index_cast %c5_i32 : i32 to index
    %31 = memref.load %arg0[%30] : memref<24xi32, #tpu.memory_space<smem>>
    %32 = arith.index_cast %31 : i32 to index
    %c0_9 = arith.constant 0 : index
    %33 = vector.load %arg1[%32, %c0_9] : memref<16x32xf32, #tpu.memory_space<vmem>>, vector<1x32xf32>
    %34 = arith.index_cast %c5_i32 : i32 to index
    %c0_10 = arith.constant 0 : index
    %35 = vector.load %arg8[%34, %c0_10] : memref<24x32xf32, #tpu.memory_space<vmem>>, vector<1x32xf32>
    tpu.vector_store %arg8[%34, %c0_10], %33 {strides = array<i32>} : memref<24x32xf32, #tpu.memory_space<vmem>>, vector<1x32xf32>,
    %c6_i32 = arith.constant 6 : i32
    %36 = arith.index_cast %c6_i32 : i32 to index
    %37 = memref.load %arg0[%36] : memref<24xi32, #tpu.memory_space<smem>>
    %38 = arith.index_cast %37 : i32 to index
    %c0_11 = arith.constant 0 : index
    %39 = vector.load %arg1[%38, %c0_11] : memref<16x32xf32, #tpu.memory_space<vmem>>, vector<1x32xf32>
    %40 = arith.index_cast %c6_i32 : i32 to index
    %c0_12 = arith.constant 0 : index
    %41 = vector.load %arg8[%40, %c0_12] : memref<24x32xf32, #tpu.memory_space<vmem>>, vector<1x32xf32>
    tpu.vector_store %arg8[%40, %c0_12], %39 {strides = array<i32>} : memref<24x32xf32, #tpu.memory_space<vmem>>, vector<1x32xf32>,
    %c7_i32 = arith.constant 7 : i32
    %42 = arith.index_cast %c7_i32 : i32 to index
    %43 = memref.load %arg0[%42] : memref<24xi32, #tpu.memory_space<smem>>
    %44 = arith.index_cast %43 : i32 to index
    %c0_13 = arith.constant 0 : index
    %45 = vector.load %arg1[%44, %c0_13] : memref<16x32xf32, #tpu.memory_space<vmem>>, vector<1x32xf32>
    %46 = arith.index_cast %c7_i32 : i32 to index
    %c0_14 = arith.constant 0 : index
    %47 = vector.load %arg8[%46, %c0_14] : memref<24x32xf32, #tpu.memory_space<vmem>>, vector<1x32xf32>
    tpu.vector_store %arg8[%46, %c0_14], %45 {strides = array<i32>} : memref<24x32xf32, #tpu.memory_space<vmem>>, vector<1x32xf32>,
    %c8_i32 = arith.constant 8 : i32
    %48 = arith.index_cast %c8_i32 : i32 to index
    %49 = memref.load %arg0[%48] : memref<24xi32, #tpu.memory_space<smem>>
    %50 = arith.index_cast %49 : i32 to index
    %c0_15 = arith.constant 0 : index
    %51 = vector.load %arg1[%50, %c0_15] : memref<16x32xf32, #tpu.memory_space<vmem>>, vector<1x32xf32>
    %52 = arith.index_cast %c8_i32 : i32 to index
    %c0_16 = arith.constant 0 : index
    %53 = vector.load %arg8[%52, %c0_16] : memref<24x32xf32, #tpu.memory_space<vmem>>, vector<1x32xf32>
    tpu.vector_store %arg8[%52, %c0_16], %51 {strides = array<i32>} : memref<24x32xf32, #tpu.memory_space<vmem>>, vector<1x32xf32>,
    %c9_i32 = arith.constant 9 : i32
    %54 = arith.index_cast %c9_i32 : i32 to index
    %55 = memref.load %arg0[%54] : memref<24xi32, #tpu.memory_space<smem>>
    %56 = arith.index_cast %55 : i32 to index
    %c0_17 = arith.constant 0 : index
    %57 = vector.load %arg1[%56, %c0_17] : memref<16x32xf32, #tpu.memory_space<vmem>>, vector<1x32xf32>
    %58 = arith.index_cast %c9_i32 : i32 to index
    %c0_18 = arith.constant 0 : index
    %59 = vector.load %arg8[%58, %c0_18] : memref<24x32xf32, #tpu.memory_space<vmem>>, vector<1x32xf32>
    tpu.vector_store %arg8[%58, %c0_18], %57 {strides = array<i32>} : memref<24x32xf32, #tpu.memory_space<vmem>>, vector<1x32xf32>,
    %c10_i32 = arith.constant 10 : i32
    %60 = arith.index_cast %c10_i32 : i32 to index
    %61 = memref.load %arg0[%60] : memref<24xi32, #tpu.memory_space<smem>>
    %62 = arith.index_cast %61 : i32 to index
    %c0_19 = arith.constant 0 : index
    %63 = vector.load %arg1[%62, %c0_19] : memref<16x32xf32, #tpu.memory_space<vmem>>, vector<1x32xf32>
    %64 = arith.index_cast %c10_i32 : i32 to index
    %c0_20 = arith.constant 0 : index
    %65 = vector.load %arg8[%64, %c0_20] : memref<24x32xf32, #tpu.memory_space<vmem>>, vector<1x32xf32>
    tpu.vector_store %arg8[%64, %c0_20], %63 {strides = array<i32>} : memref<24x32xf32, #tpu.memory_space<vmem>>, vector<1x32xf32>,
    %c11_i32 = arith.constant 11 : i32
    %66 = arith.index_cast %c11_i32 : i32 to index
    %67 = memref.load %arg0[%66] : memref<24xi32, #tpu.memory_space<smem>>
    %68 = arith.index_cast %67 : i32 to index
    %c0_21 = arith.constant 0 : index
    %69 = vector.load %arg1[%68, %c0_21] : memref<16x32xf32, #tpu.memory_space<vmem>>, vector<1x32xf32>
    %70 = arith.index_cast %c11_i32 : i32 to index
    %c0_22 = arith.constant 0 : index
    %71 = vector.load %arg8[%70, %c0_22] : memref<24x32xf32, #tpu.memory_space<vmem>>, vector<1x32xf32>
    tpu.vector_store %arg8[%70, %c0_22], %69 {strides = array<i32>} : memref<24x32xf32, #tpu.memory_space<vmem>>, vector<1x32xf32>,
    %c12_i32 = arith.constant 12 : i32
    %72 = arith.index_cast %c12_i32 : i32 to index
    %73 = memref.load %arg0[%72] : memref<24xi32, #tpu.memory_space<smem>>
    %74 = arith.index_cast %73 : i32 to index
    %c0_23 = arith.constant 0 : index
    %75 = vector.load %arg1[%74, %c0_23] : memref<16x32xf32, #tpu.memory_space<vmem>>, vector<1x32xf32>
    %76 = arith.index_cast %c12_i32 : i32 to index
    %c0_24 = arith.constant 0 : index
    %77 = vector.load %arg8[%76, %c0_24] : memref<24x32xf32, #tpu.memory_space<vmem>>, vector<1x32xf32>
    tpu.vector_store %arg8[%76, %c0_24], %75 {strides = array<i32>} : memref<24x32xf32, #tpu.memory_space<vmem>>, vector<1x32xf32>,
    %c13_i32 = arith.constant 13 : i32
    %78 = arith.index_cast %c13_i32 : i32 to index
    %79 = memref.load %arg0[%78] : memref<24xi32, #tpu.memory_space<smem>>
    %80 = arith.index_cast %79 : i32 to index
    %c0_25 = arith.constant 0 : index
    %81 = vector.load %arg1[%80, %c0_25] : memref<16x32xf32, #tpu.memory_space<vmem>>, vector<1x32xf32>
    %82 = arith.index_cast %c13_i32 : i32 to index
    %c0_26 = arith.constant 0 : index
    %83 = vector.load %arg8[%82, %c0_26] : memref<24x32xf32, #tpu.memory_space<vmem>>, vector<1x32xf32>
    tpu.vector_store %arg8[%82, %c0_26], %81 {strides = array<i32>} : memref<24x32xf32, #tpu.memory_space<vmem>>, vector<1x32xf32>,
    %c14_i32 = arith.constant 14 : i32
    %84 = arith.index_cast %c14_i32 : i32 to index
    %85 = memref.load %arg0[%84] : memref<24xi32, #tpu.memory_space<smem>>
    %86 = arith.index_cast %85 : i32 to index
    %c0_27 = arith.constant 0 : index
    %87 = vector.load %arg1[%86, %c0_27] : memref<16x32xf32, #tpu.memory_space<vmem>>, vector<1x32xf32>
    %88 = arith.index_cast %c14_i32 : i32 to index
    %c0_28 = arith.constant 0 : index
    %89 = vector.load %arg8[%88, %c0_28] : memref<24x32xf32, #tpu.memory_space<vmem>>, vector<1x32xf32>
    tpu.vector_store %arg8[%88, %c0_28], %87 {strides = array<i32>} : memref<24x32xf32, #tpu.memory_space<vmem>>, vector<1x32xf32>,
    %c15_i32 = arith.constant 15 : i32
    %90 = arith.index_cast %c15_i32 : i32 to index
    %91 = memref.load %arg0[%90] : memref<24xi32, #tpu.memory_space<smem>>
    %92 = arith.index_cast %91 : i32 to index
    %c0_29 = arith.constant 0 : index
    %93 = vector.load %arg1[%92, %c0_29] : memref<16x32xf32, #tpu.memory_space<vmem>>, vector<1x32xf32>
    %94 = arith.index_cast %c15_i32 : i32 to index
    %c0_30 = arith.constant 0 : index
    %95 = vector.load %arg8[%94, %c0_30] : memref<24x32xf32, #tpu.memory_space<vmem>>, vector<1x32xf32>
    tpu.vector_store %arg8[%94, %c0_30], %93 {strides = array<i32>} : memref<24x32xf32, #tpu.memory_space<vmem>>, vector<1x32xf32>,
    %c16_i32 = arith.constant 16 : i32
    %96 = arith.index_cast %c16_i32 : i32 to index
    %97 = memref.load %arg0[%96] : memref<24xi32, #tpu.memory_space<smem>>
    %98 = arith.index_cast %97 : i32 to index
    %c0_31 = arith.constant 0 : index
    %99 = vector.load %arg1[%98, %c0_31] : memref<16x32xf32, #tpu.memory_space<vmem>>, vector<1x32xf32>
    %100 = arith.index_cast %c16_i32 : i32 to index
    %c0_32 = arith.constant 0 : index
    %101 = vector.load %arg8[%100, %c0_32] : memref<24x32xf32, #tpu.memory_space<vmem>>, vector<1x32xf32>
    tpu.vector_store %arg8[%100, %c0_32], %99 {strides = array<i32>} : memref<24x32xf32, #tpu.memory_space<vmem>>, vector<1x32xf32>,
    %c17_i32 = arith.constant 17 : i32
    %102 = arith.index_cast %c17_i32 : i32 to index
    %103 = memref.load %arg0[%102] : memref<24xi32, #tpu.memory_space<smem>>
    %104 = arith.index_cast %103 : i32 to index
    %c0_33 = arith.constant 0 : index
    %105 = vector.load %arg1[%104, %c0_33] : memref<16x32xf32, #tpu.memory_space<vmem>>, vector<1x32xf32>
    %106 = arith.index_cast %c17_i32 : i32 to index
    %c0_34 = arith.constant 0 : index
    %107 = vector.load %arg8[%106, %c0_34] : memref<24x32xf32, #tpu.memory_space<vmem>>, vector<1x32xf32>
    tpu.vector_store %arg8[%106, %c0_34], %105 {strides = array<i32>} : memref<24x32xf32, #tpu.memory_space<vmem>>, vector<1x32xf32>,
    %c18_i32 = arith.constant 18 : i32
    %108 = arith.index_cast %c18_i32 : i32 to index
    %109 = memref.load %arg0[%108] : memref<24xi32, #tpu.memory_space<smem>>
    %110 = arith.index_cast %109 : i32 to index
    %c0_35 = arith.constant 0 : index
    %111 = vector.load %arg1[%110, %c0_35] : memref<16x32xf32, #tpu.memory_space<vmem>>, vector<1x32xf32>
    %112 = arith.index_cast %c18_i32 : i32 to index
    %c0_36 = arith.constant 0 : index
    %113 = vector.load %arg8[%112, %c0_36] : memref<24x32xf32, #tpu.memory_space<vmem>>, vector<1x32xf32>
    tpu.vector_store %arg8[%112, %c0_36], %111 {strides = array<i32>} : memref<24x32xf32, #tpu.memory_space<vmem>>, vector<1x32xf32>,
    %c19_i32 = arith.constant 19 : i32
    %114 = arith.index_cast %c19_i32 : i32 to index
    %115 = memref.load %arg0[%114] : memref<24xi32, #tpu.memory_space<smem>>
    %116 = arith.index_cast %115 : i32 to index
    %c0_37 = arith.constant 0 : index
    %117 = vector.load %arg1[%116, %c0_37] : memref<16x32xf32, #tpu.memory_space<vmem>>, vector<1x32xf32>
    %118 = arith.index_cast %c19_i32 : i32 to index
    %c0_38 = arith.constant 0 : index
    %119 = vector.load %arg8[%118, %c0_38] : memref<24x32xf32, #tpu.memory_space<vmem>>, vector<1x32xf32>
    tpu.vector_store %arg8[%118, %c0_38], %117 {strides = array<i32>} : memref<24x32xf32, #tpu.memory_space<vmem>>, vector<1x32xf32>,
    %c20_i32 = arith.constant 20 : i32
    %120 = arith.index_cast %c20_i32 : i32 to index
    %121 = memref.load %arg0[%120] : memref<24xi32, #tpu.memory_space<smem>>
    %122 = arith.index_cast %121 : i32 to index
    %c0_39 = arith.constant 0 : index
    %123 = vector.load %arg1[%122, %c0_39] : memref<16x32xf32, #tpu.memory_space<vmem>>, vector<1x32xf32>
    %124 = arith.index_cast %c20_i32 : i32 to index
    %c0_40 = arith.constant 0 : index
    %125 = vector.load %arg8[%124, %c0_40] : memref<24x32xf32, #tpu.memory_space<vmem>>, vector<1x32xf32>
    tpu.vector_store %arg8[%124, %c0_40], %123 {strides = array<i32>} : memref<24x32xf32, #tpu.memory_space<vmem>>, vector<1x32xf32>,
    %c21_i32 = arith.constant 21 : i32
    %126 = arith.index_cast %c21_i32 : i32 to index
    %127 = memref.load %arg0[%126] : memref<24xi32, #tpu.memory_space<smem>>
    %128 = arith.index_cast %127 : i32 to index
    %c0_41 = arith.constant 0 : index
    %129 = vector.load %arg1[%128, %c0_41] : memref<16x32xf32, #tpu.memory_space<vmem>>, vector<1x32xf32>
    %130 = arith.index_cast %c21_i32 : i32 to index
    %c0_42 = arith.constant 0 : index
    %131 = vector.load %arg8[%130, %c0_42] : memref<24x32xf32, #tpu.memory_space<vmem>>, vector<1x32xf32>
    tpu.vector_store %arg8[%130, %c0_42], %129 {strides = array<i32>} : memref<24x32xf32, #tpu.memory_space<vmem>>, vector<1x32xf32>,
    %c22_i32 = arith.constant 22 : i32
    %132 = arith.index_cast %c22_i32 : i32 to index
    %133 = memref.load %arg0[%132] : memref<24xi32, #tpu.memory_space<smem>>
    %134 = arith.index_cast %133 : i32 to index
    %c0_43 = arith.constant 0 : index
    %135 = vector.load %arg1[%134, %c0_43] : memref<16x32xf32, #tpu.memory_space<vmem>>, vector<1x32xf32>
    %136 = arith.index_cast %c22_i32 : i32 to index
    %c0_44 = arith.constant 0 : index
    %137 = vector.load %arg8[%136, %c0_44] : memref<24x32xf32, #tpu.memory_space<vmem>>, vector<1x32xf32>
    tpu.vector_store %arg8[%136, %c0_44], %135 {strides = array<i32>} : memref<24x32xf32, #tpu.memory_space<vmem>>, vector<1x32xf32>,
    %c23_i32 = arith.constant 23 : i32
    %138 = arith.index_cast %c23_i32 : i32 to index
    %139 = memref.load %arg0[%138] : memref<24xi32, #tpu.memory_space<smem>>
    %140 = arith.index_cast %139 : i32 to index
    %c0_45 = arith.constant 0 : index
    %141 = vector.load %arg1[%140, %c0_45] : memref<16x32xf32, #tpu.memory_space<vmem>>, vector<1x32xf32>
    %142 = arith.index_cast %c23_i32 : i32 to index
    %c0_46 = arith.constant 0 : index
    %143 = vector.load %arg8[%142, %c0_46] : memref<24x32xf32, #tpu.memory_space<vmem>>, vector<1x32xf32>
    tpu.vector_store %arg8[%142, %c0_46], %141 {strides = array<i32>} : memref<24x32xf32, #tpu.memory_space<vmem>>, vector<1x32xf32>,
    %c24_i32 = arith.constant 24 : i32
    %c0_47 = arith.constant 0 : index
    %c0_48 = arith.constant 0 : index
    %144 = vector.load %arg8[%c0_47, %c0_48] : memref<24x32xf32, #tpu.memory_space<vmem>>, vector<24x32xf32>
    %c0_49 = arith.constant 0 : index
    %c0_50 = arith.constant 0 : index
    %145 = vector.load %arg2[%c0_49, %c0_50] : memref<24x1xi32, #tpu.memory_space<vmem>>, vector<24x1xi32>
    %cst = arith.constant 0.000000e+00 : f32
    %146 = vector.broadcast %cst : f32 to vector<24x128xf32>
    %c0_51 = arith.constant 0 : index
    %c0_52 = arith.constant 0 : index
    %c0_53 = arith.constant 0 : index
    %147 = vector.load %arg5[%c0_51, %c0_52, %c0_53] : memref<4x32x128xf32, #tpu.memory_space<vmem>>, vector<1x32x128xf32>
    %148 = vector.shape_cast %147 : vector<1x32x128xf32> to vector<32x128xf32>
    %cst_54 = arith.constant dense<0.000000e+00> : vector<24x128xf32>
    %149 = tpu.matmul %144, %148, %cst_54 {dimension_numbers = #tpu.dot_dimension_numbers<[1], [0], [0], [1], [0, 0, 1, 1], [], []>} : vector<24x32xf32>, vector<32x128xf32>, vector<24x128xf32> -> vector<24x128xf32>
    %c0_i32_55 = arith.constant 0 : i32
    %150 = vector.broadcast %c0_i32_55 : i32 to vector<24x1xi32>
    %151 = arith.cmpi eq, %145, %150 : vector<24x1xi32>
    %152 = arith.extui %151 : vector<24x1xi1> to vector<24x1xi32>
    %153 = arith.sitofp %152 : vector<24x1xi32> to vector<24x1xf32>
    %154 = vector.broadcast %153 : vector<24x1xf32> to vector<24x128xf32>
    %155 = arith.mulf %154, %149 : vector<24x128xf32>
    %156 = arith.addf %146, %155 : vector<24x128xf32>
    %c1 = arith.constant 1 : index
    %c0_56 = arith.constant 0 : index
    %c0_57 = arith.constant 0 : index
    %157 = vector.load %arg5[%c1, %c0_56, %c0_57] : memref<4x32x128xf32, #tpu.memory_space<vmem>>, vector<1x32x128xf32>
    %158 = vector.shape_cast %157 : vector<1x32x128xf32> to vector<32x128xf32>
    %cst_58 = arith.constant dense<0.000000e+00> : vector<24x128xf32>
    %159 = tpu.matmul %144, %158, %cst_58 {dimension_numbers = #tpu.dot_dimension_numbers<[1], [0], [0], [1], [0, 0, 1, 1], [], []>} : vector<24x32xf32>, vector<32x128xf32>, vector<24x128xf32> -> vector<24x128xf32>
    %c1_i32_59 = arith.constant 1 : i32
    %160 = vector.broadcast %c1_i32_59 : i32 to vector<24x1xi32>
    %161 = arith.cmpi eq, %145, %160 : vector<24x1xi32>
    %162 = arith.extui %161 : vector<24x1xi1> to vector<24x1xi32>
    %163 = arith.sitofp %162 : vector<24x1xi32> to vector<24x1xf32>
    %164 = vector.broadcast %163 : vector<24x1xf32> to vector<24x128xf32>
    %165 = arith.mulf %164, %159 : vector<24x128xf32>
    %166 = arith.addf %156, %165 : vector<24x128xf32>
    %c2 = arith.constant 2 : index
    %c0_60 = arith.constant 0 : index
    %c0_61 = arith.constant 0 : index
    %167 = vector.load %arg5[%c2, %c0_60, %c0_61] : memref<4x32x128xf32, #tpu.memory_space<vmem>>, vector<1x32x128xf32>
    %168 = vector.shape_cast %167 : vector<1x32x128xf32> to vector<32x128xf32>
    %cst_62 = arith.constant dense<0.000000e+00> : vector<24x128xf32>
    %169 = tpu.matmul %144, %168, %cst_62 {dimension_numbers = #tpu.dot_dimension_numbers<[1], [0], [0], [1], [0, 0, 1, 1], [], []>} : vector<24x32xf32>, vector<32x128xf32>, vector<24x128xf32> -> vector<24x128xf32>
    %c2_i32_63 = arith.constant 2 : i32
    %170 = vector.broadcast %c2_i32_63 : i32 to vector<24x1xi32>
    %171 = arith.cmpi eq, %145, %170 : vector<24x1xi32>
    %172 = arith.extui %171 : vector<24x1xi1> to vector<24x1xi32>
    %173 = arith.sitofp %172 : vector<24x1xi32> to vector<24x1xf32>
    %174 = vector.broadcast %173 : vector<24x1xf32> to vector<24x128xf32>
    %175 = arith.mulf %174, %169 : vector<24x128xf32>
    %176 = arith.addf %166, %175 : vector<24x128xf32>
    %c3 = arith.constant 3 : index
    %c0_64 = arith.constant 0 : index
    %c0_65 = arith.constant 0 : index
    %177 = vector.load %arg5[%c3, %c0_64, %c0_65] : memref<4x32x128xf32, #tpu.memory_space<vmem>>, vector<1x32x128xf32>
    %178 = vector.shape_cast %177 : vector<1x32x128xf32> to vector<32x128xf32>
    %cst_66 = arith.constant dense<0.000000e+00> : vector<24x128xf32>
    %179 = tpu.matmul %144, %178, %cst_66 {dimension_numbers = #tpu.dot_dimension_numbers<[1], [0], [0], [1], [0, 0, 1, 1], [], []>} : vector<24x32xf32>, vector<32x128xf32>, vector<24x128xf32> -> vector<24x128xf32>
    %c3_i32_67 = arith.constant 3 : i32
    %180 = vector.broadcast %c3_i32_67 : i32 to vector<24x1xi32>
    %181 = arith.cmpi eq, %145, %180 : vector<24x1xi32>
    %182 = arith.extui %181 : vector<24x1xi1> to vector<24x1xi32>
    %183 = arith.sitofp %182 : vector<24x1xi32> to vector<24x1xf32>
    %184 = vector.broadcast %183 : vector<24x1xf32> to vector<24x128xf32>
    %185 = arith.mulf %184, %179 : vector<24x128xf32>
    %186 = arith.addf %176, %185 : vector<24x128xf32>
    %187 = tpu.iota {dimensions = array<i32: 0>} : vector<16x24xi32>
    %c0_68 = arith.constant 0 : index
    %c0_69 = arith.constant 0 : index
    %188 = vector.load %arg3[%c0_68, %c0_69] : memref<1x24xi32, #tpu.memory_space<vmem>>, vector<1x24xi32>
    %189 = vector.broadcast %188 : vector<1x24xi32> to vector<16x24xi32>
    %190 = arith.cmpi eq, %187, %189 : vector<16x24xi32>
    %191 = arith.extui %190 : vector<16x24xi1> to vector<16x24xi32>
    %192 = arith.sitofp %191 : vector<16x24xi32> to vector<16x24xf32>
    %cst_70 = arith.constant dense<0.000000e+00> : vector<16x128xf32>
    %193 = tpu.matmul %192, %186, %cst_70 {dimension_numbers = #tpu.dot_dimension_numbers<[1], [0], [0], [1], [0, 0, 1, 1], [], []>} : vector<16x24xf32>, vector<24x128xf32>, vector<16x128xf32> -> vector<16x128xf32>
    %c0_71 = arith.constant 0 : index
    %c0_72 = arith.constant 0 : index
    %194 = vector.load %arg4[%c0_71, %c0_72] : memref<16x1xf32, #tpu.memory_space<vmem>>, vector<16x1xf32>
    %195 = vector.broadcast %194 : vector<16x1xf32> to vector<16x128xf32>
    %196 = arith.mulf %193, %195 : vector<16x128xf32>
    %c0_73 = arith.constant 0 : index
    %c0_74 = arith.constant 0 : index
    %197 = vector.load %arg1[%c0_73, %c0_74] : memref<16x32xf32, #tpu.memory_space<vmem>>, vector<16x32xf32>
    %c0_75 = arith.constant 0 : index
    %c0_76 = arith.constant 0 : index
    %198 = vector.load %arg6[%c0_75, %c0_76] : memref<32x128xf32, #tpu.memory_space<vmem>>, vector<32x128xf32>
    %cst_77 = arith.constant dense<0.000000e+00> : vector<16x128xf32>
    %199 = tpu.matmul %197, %198, %cst_77 {dimension_numbers = #tpu.dot_dimension_numbers<[1], [0], [0], [1], [0, 0, 1, 1], [], []>} : vector<16x32xf32>, vector<32x128xf32>, vector<16x128xf32> -> vector<16x128xf32>
    %200 = arith.addf %196, %199 : vector<16x128xf32>
    %201 = math.tanh %200 : vector<16x128xf32>
    %c0_78 = arith.constant 0 : index
    %c0_79 = arith.constant 0 : index
    %202 = vector.load %arg7[%c0_78, %c0_79] : memref<16x128xf32, #tpu.memory_space<vmem>>, vector<16x128xf32>
    tpu.vector_store %arg7[%c0_78, %c0_79], %201 {strides = array<i32>} : memref<16x128xf32, #tpu.memory_space<vmem>>, vector<16x128xf32>,
    return
  }
}

</mosaic_0001>

<llo_original>
// kernel: tpu_custom_call.1
$region0: #{tpu_custom_call.1}
  #allocation0 [shape = 'u32[]', space=smem, size = 0x4, offset = 0x4, fixed_abs, tag = 'smem constant byte address 0x4 - core index']
  #allocation1 [shape = 'u32[72,128]{1,0:T(1,128)}', space=vmem, size = 0x9000, scoped, tag = 'internal scratch']
  #allocation2 [shape = 'f32[24,32]{1,0:T(8,128)}', space=vmem, size = 0x3000, scoped, tag = 'scratch operand']
  %s0 = inlined_call_operand.vmem [shape: s32[24], index: 0, kind: input, shape index: {}]
  %s1 = inlined_call_operand.hbm [shape: f32[16,32], index: 1, kind: input, shape index: {}]
  %s2 = inlined_call_operand.vmem [shape: s32[24,1], index: 2, kind: input, shape index: {}]
  %s3 = inlined_call_operand.vmem [shape: s32[1,24], index: 3, kind: input, shape index: {}]
  %s4 = inlined_call_operand.vmem [shape: f32[16,1], index: 4, kind: input, shape index: {}]
  %s5 = inlined_call_operand.hbm [shape: f32[4,32,128], index: 5, kind: input, shape index: {}]
  %s6 = inlined_call_operand.vmem [shape: f32[32,128], index: 6, kind: input, shape index: {}]
  %s7 = inlined_call_operand.hbm [shape: f32[16,128], index: 7, kind: output, shape index: {}]
  %s8 = sld [smem:[#allocation0]]
  $region50: #{tpu_custom_call.1} parent=0
    _
  %s10 = ssub.s32 1, %s8
  %s11 = scalar_select 0, %s10, %s8
  $region1: #{tpu_custom_call.1} parent=0
    #allocation3 [shape = 'u8[512]{0}', space=smem, size = 0x200, scoped, tag = 'input window, operand 0, single buffered']
    #allocation4 [shape = 's32[1]{0}', space=sflag, size = 0x4, scoped, tag = 'scoped memory for tpu_custom_call.1']
    #allocation5 [shape = 's32[1]{0}', space=sflag, size = 0x4, scoped, tag = 'scoped memory for tpu_custom_call.1']
    #allocation6 [shape = 's32[1]{0}', space=sflag, size = 0x4, scoped, tag = 'scoped memory for tpu_custom_call.1']
    #allocation7 [shape = 'u8[8192]{0}', space=vmem, size = 0x2000, scoped, tag = 'input window, operand 1, single buffered']
    #allocation8 [shape = 'u8[65536]{0}', space=vmem, size = 0x10000, scoped, tag = 'input window, operand 5, single buffered']
    #allocation9 [shape = 's32[1]{0}', space=sflag, size = 0x4, scoped, tag = 'scoped memory for tpu_custom_call.1']
    #allocation10 [shape = 'u8[8192]{0}', space=vmem, size = 0x2000, scoped, tag = 'output window, operand 0, single buffered']
    %12 = vsyncpa [#allocation6], 0
    %13 = vsyncpa [#allocation4], 0
    %14 = vsyncpa [#allocation9], 0
    %15 = vsyncpa [#allocation5], 0
    // Predicated region
    $region2: #{tpu_custom_call.1} parent=1 // pred_check
      _
    $region3: #{tpu_custom_call.1} parent=1 // pred_check_branch
      %17 = sbr.rel (0) target = $region5
    $region4: #{tpu_custom_call.1} parent=1 // pred_region
      %19 = vsyncadd [#allocation6], 0
      %s21 = sshll.u32 %s0, 4
      %s22 = int_to_ptr.vmem [resolvable:$true] %s21
      %24 = dma.vmem_to_smem %s22, 16, [#allocation3], [#allocation6]
    $region5: #{tpu_custom_call.1} parent=1 // pred_fallthru
      _
    // Predicated region
    $region6: #{tpu_custom_call.1} parent=1 // pred_check
      _
    $region7: #{tpu_custom_call.1} parent=1 // pred_check_branch
      %26 = sbr.rel (0) target = $region9
    $region8: #{tpu_custom_call.1} parent=1 // pred_region
      %28 = vsyncadd [#allocation4], 0
      %s29 = sshll.u32 %s1, 4
      %s30 = int_to_ptr.hbm [resolvable:$true] %s29
      %s31 = sshll.u32 [#allocation7], 4
      %s32 = int_to_ptr.vmem [resolvable:$true] %s31
      %37 = dma.hbm_to_vmem [thread:$0]  %s30, 256, %s32, [#allocation4], 128, 128, 8
    $region9: #{tpu_custom_call.1} parent=1 // pred_fallthru
      _
    // Predicated region
    $region10: #{tpu_custom_call.1} parent=1 // pred_check
      _
    $region11: #{tpu_custom_call.1} parent=1 // pred_check_branch
      %39 = sbr.rel (0) target = $region13
    $region12: #{tpu_custom_call.1} parent=1 // pred_region
      _
    $region13: #{tpu_custom_call.1} parent=1 // pred_fallthru
      _
    // Predicated region
    $region14: #{tpu_custom_call.1} parent=1 // pred_check
      _
    $region15: #{tpu_custom_call.1} parent=1 // pred_check_branch
      %41 = sbr.rel (0) target = $region17
    $region16: #{tpu_custom_call.1} parent=1 // pred_region
      _
    $region17: #{tpu_custom_call.1} parent=1 // pred_fallthru
      _
    // Predicated region
    $region18: #{tpu_custom_call.1} parent=1 // pred_check
      _
    $region19: #{tpu_custom_call.1} parent=1 // pred_check_branch
      %43 = sbr.rel (0) target = $region21
    $region20: #{tpu_custom_call.1} parent=1 // pred_region
      _
    $region21: #{tpu_custom_call.1} parent=1 // pred_fallthru
      _
    // Predicated region
    $region22: #{tpu_custom_call.1} parent=1 // pred_check
      _
    $region23: #{tpu_custom_call.1} parent=1 // pred_check_branch
      %45 = sbr.rel (0) target = $region25
    $region24: #{tpu_custom_call.1} parent=1 // pred_region
      %47 = vsyncadd [#allocation9], 0
      %s48 = sshll.u32 %s5, 4
      %s49 = int_to_ptr.hbm [resolvable:$true] %s48
      %s50 = sshll.u32 [#allocation8], 4
      %s51 = int_to_ptr.vmem [resolvable:$true] %s50
      %56 = dma.hbm_to_vmem [thread:$0]  %s49, 2048, %s51, [#allocation9], 128, 128, 8
    $region25: #{tpu_custom_call.1} parent=1 // pred_fallthru
      _
    // Predicated region
    $region26: #{tpu_custom_call.1} parent=1 // pred_check
      _
    $region27: #{tpu_custom_call.1} parent=1 // pred_check_branch
      %58 = sbr.rel (0) target = $region29
    $region28: #{tpu_custom_call.1} parent=1 // pred_region
      _
    $region29: #{tpu_custom_call.1} parent=1 // pred_fallthru
      _
    // Predicated region
    $region30: #{tpu_custom_call.1} parent=1 // pred_check
      _
    $region31: #{tpu_custom_call.1} parent=1 // pred_check_branch
      %60 = sbr.rel (0) target = $region33
    $region32: #{tpu_custom_call.1} parent=1 // pred_region
      %62 = dma.done [#allocation6], 16
    $region33: #{tpu_custom_call.1} parent=1 // pred_fallthru
      _
    // Predicated region
    $region34: #{tpu_custom_call.1} parent=1 // pred_check
      _
    $region35: #{tpu_custom_call.1} parent=1 // pred_check_branch
      %64 = sbr.rel (0) target = $region37
    $region36: #{tpu_custom_call.1} parent=1 // pred_region
      %66 = dma.done [#allocation4], 256
    $region37: #{tpu_custom_call.1} parent=1 // pred_fallthru
      _
    // Predicated region
    $region38: #{tpu_custom_call.1} parent=1 // pred_check
      _
    $region39: #{tpu_custom_call.1} parent=1 // pred_check_branch
      %68 = sbr.rel (0) target = $region41
    $region40: #{tpu_custom_call.1} parent=1 // pred_region
      %70 = dma.done [#allocation9], 2048
    $region41: #{tpu_custom_call.1} parent=1 // pred_fallthru
      _
    %71 = sfence
    %s72 = sld [smem:[#allocation3]]
    %s73 = scalar_lea.vmem [#allocation7], %s72
    %v74 = vld [vmem:[%s73] sm:$0x1]
    %vm75 = vcmask 253952
    %76 = vst.msk [vmem:[#allocation2] sm:$0x1] %vm75, %v74
    %s77 = sld [smem:[#allocation3 + $0x1]]
    %s78 = scalar_lea.vmem [#allocation7], %s77
    %v79 = vld [vmem:[%s78] sm:$0x1]
    %80 = vst.msk [vmem:[#allocation2 + $0x1] sm:$0x1] %vm75, %v79
    %s81 = sld [smem:[#allocation3 + $0x2]]
    %s82 = scalar_lea.vmem [#allocation7], %s81
    %v83 = vld [vmem:[%s82] sm:$0x1]
    %84 = vst.msk [vmem:[#allocation2 + $0x2] sm:$0x1] %vm75, %v83
    %s85 = sld [smem:[#allocation3 + $0x3]]
    %s86 = scalar_lea.vmem [#allocation7], %s85
    %v87 = vld [vmem:[%s86] sm:$0x1]
    %88 = vst.msk [vmem:[#allocation2 + $0x3] sm:$0x1] %vm75, %v87
    %s89 = sld [smem:[#allocation3 + $0x4]]
    %s90 = scalar_lea.vmem [#allocation7], %s89
    %v91 = vld [vmem:[%s90] sm:$0x1]
    %92 = vst.msk [vmem:[#allocation2 + $0x4] sm:$0x1] %vm75, %v91
    %s93 = sld [smem:[#allocation3 + $0x5]]
    %s94 = scalar_lea.vmem [#allocation7], %s93
    %v95 = vld [vmem:[%s94] sm:$0x1]
    %96 = vst.msk [vmem:[#allocation2 + $0x5] sm:$0x1] %vm75, %v95
    %s97 = sld [smem:[#allocation3 + $0x6]]
    %s98 = scalar_lea.vmem [#allocation7], %s97
    %v99 = vld [vmem:[%s98] sm:$0x1]
    %100 = vst.msk [vmem:[#allocation2 + $0x6] sm:$0x1] %vm75, %v99
    %s101 = sld [smem:[#allocation3 + $0x7]]
    %s102 = scalar_lea.vmem [#allocation7], %s101
    %v103 = vld [vmem:[%s102] sm:$0x1]
    %104 = vst.msk [vmem:[#allocation2 + $0x7] sm:$0x1] %vm75, %v103
    %s105 = sld [smem:[#allocation3 + $0x8]]
    %s106 = scalar_lea.vmem [#allocation7], %s105
    %v107 = vld [vmem:[%s106] sm:$0x1]
    %108 = vst.msk [vmem:[#allocation2 + $0x8] sm:$0x1] %vm75, %v107
    %s109 = sld [smem:[#allocation3 + $0x9]]
    %s110 = scalar_lea.vmem [#allocation7], %s109
    %v111 = vld [vmem:[%s110] sm:$0x1]
    %112 = vst.msk [vmem:[#allocation2 + $0x9] sm:$0x1] %vm75, %v111
    %s113 = sld [smem:[#allocation3 + $0xa]]
    %s114 = scalar_lea.vmem [#allocation7], %s113
    %v115 = vld [vmem:[%s114] sm:$0x1]
    %116 = vst.msk [vmem:[#allocation2 + $0xa] sm:$0x1] %vm75, %v115
    %s117 = sld [smem:[#allocation3 + $0xb]]
    %s118 = scalar_lea.vmem [#allocation7], %s117
    %v119 = vld [vmem:[%s118] sm:$0x1]
    %120 = vst.msk [vmem:[#allocation2 + $0xb] sm:$0x1] %vm75, %v119
    %s121 = sld [smem:[#allocation3 + $0xc]]
    %s122 = scalar_lea.vmem [#allocation7], %s121
    %v123 = vld [vmem:[%s122] sm:$0x1]
    %124 = vst.msk [vmem:[#allocation2 + $0xc] sm:$0x1] %vm75, %v123
    %s125 = sld [smem:[#allocation3 + $0xd]]
    %s126 = scalar_lea.vmem [#allocation7], %s125
    %v127 = vld [vmem:[%s126] sm:$0x1]
    %128 = vst.msk [vmem:[#allocation2 + $0xd] sm:$0x1] %vm75, %v127
    %s129 = sld [smem:[#allocation3 + $0xe]]
    %s130 = scalar_lea.vmem [#allocation7], %s129
    %v131 = vld [vmem:[%s130] sm:$0x1]
    %132 = vst.msk [vmem:[#allocation2 + $0xe] sm:$0x1] %vm75, %v131
    %s133 = sld [smem:[#allocation3 + $0xf]]
    %s134 = scalar_lea.vmem [#allocation7], %s133
    %v135 = vld [vmem:[%s134] sm:$0x1]
    %136 = vst.msk [vmem:[#allocation2 + $0xf] sm:$0x1] %vm75, %v135
    %s137 = sld [smem:[#allocation3 + $0x10]]
    %s138 = scalar_lea.vmem [#allocation7], %s137
    %v139 = vld [vmem:[%s138] sm:$0x1]
    %140 = vst.msk [vmem:[#allocation2 + $0x10] sm:$0x1] %vm75, %v139
    %s141 = sld [smem:[#allocation3 + $0x11]]
    %s142 = scalar_lea.vmem [#allocation7], %s141
    %v143 = vld [vmem:[%s142] sm:$0x1]
    %144 = vst.msk [vmem:[#allocation2 + $0x11] sm:$0x1] %vm75, %v143
    %s145 = sld [smem:[#allocation3 + $0x12]]
    %s146 = scalar_lea.vmem [#allocation7], %s145
    %v147 = vld [vmem:[%s146] sm:$0x1]
    %148 = vst.msk [vmem:[#allocation2 + $0x12] sm:$0x1] %vm75, %v147
    %s149 = sld [smem:[#allocation3 + $0x13]]
    %s150 = scalar_lea.vmem [#allocation7], %s149
    %v151 = vld [vmem:[%s150] sm:$0x1]
    %152 = vst.msk [vmem:[#allocation2 + $0x13] sm:$0x1] %vm75, %v151
    %s153 = sld [smem:[#allocation3 + $0x14]]
    %s154 = scalar_lea.vmem [#allocation7], %s153
    %v155 = vld [vmem:[%s154] sm:$0x1]
    %156 = vst.msk [vmem:[#allocation2 + $0x14] sm:$0x1] %vm75, %v155
    %s157 = sld [smem:[#allocation3 + $0x15]]
    %s158 = scalar_lea.vmem [#allocation7], %s157
    %v159 = vld [vmem:[%s158] sm:$0x1]
    %160 = vst.msk [vmem:[#allocation2 + $0x15] sm:$0x1] %vm75, %v159
    %s161 = sld [smem:[#allocation3 + $0x16]]
    %s162 = scalar_lea.vmem [#allocation7], %s161
    %v163 = vld [vmem:[%s162] sm:$0x1]
    %164 = vst.msk [vmem:[#allocation2 + $0x16] sm:$0x1] %vm75, %v163
    %s165 = sld [smem:[#allocation3 + $0x17]]
    %s166 = scalar_lea.vmem [#allocation7], %s165
    %v167 = vld [vmem:[%s166] sm:$0x1]
    %168 = vst.msk [vmem:[#allocation2 + $0x17] sm:$0x1] %vm75, %v167
    %v169 = vld [vmem:[#allocation2] sm:$0xff]
    %v170 = vld [vmem:[#allocation2 + $0x8] sm:$0xff]
    %v171 = vld [vmem:[#allocation2 + $0x10] sm:$0xff]
    %v172 = vld [vmem:[%s2] sm:$0xff]
    %v173 = vld [vmem:[%s2 + $0x8] sm:$0xff]
    %v174 = vld [vmem:[%s2 + $0x10] sm:$0xff]
    %v175 = vld [vmem:[#allocation8] sm:$0xff]
    %v176 = vld [vmem:[#allocation8 + $0x8] sm:$0xff]
    %v177 = vld [vmem:[#allocation8 + $0x10] sm:$0xff]
    %v178 = vld [vmem:[#allocation8 + $0x18] sm:$0xff]
    %vm179 = vcmask 261120
    %v181 = vsel %vm179, %v169, 0
    %v184 = vsel %vm179, %v170, 0
    %v187 = vsel %vm179, %v171, 0
    %189 = vmatpush.msra.mxu0 0.0
    %190 = vmatpush.msra.mxu0 0.0
    %191 = vmatpush.msra.mxu0 0.0
    %192 = vmatpush.msra.mxu0 0.0
    %193 = vmatpush.msra.mxu0 0.0
    %194 = vmatpush.msra.mxu0 0.0
    %195 = vmatpush.msra.mxu0 0.0
    %196 = vmatpush.msra.mxu0 0.0
    %197 = vmatpush.msra.mxu0 0.0
    %198 = vmatpush.msra.mxu0 0.0
    %199 = vmatpush.msra.mxu0 0.0
    %200 = vmatpush.msra.mxu0 0.0
    %201 = vmatpush.msra.mxu0 %v178
    %202 = vmatpush.msra.mxu0 %v177
    %203 = vmatpush.msra.mxu0 %v176
    %204 = vmatpush.msra.mxu0 %v175
    %205 = vmatmul.f32.gmra.mxu0 %v181
    %v206 = vpop.f32.mrf.mxu0
    %v207 = vadd.f32 0.0, %v206
    %208 = vmatmul.f32.gmra.mxu0 %v184
    %v209 = vpop.f32.mrf.mxu0
    %v210 = vadd.f32 0.0, %v209
    %211 = vmatmul.f32.gmra.mxu0 %v187
    %v212 = vpop.f32.mrf.mxu0
    %v213 = vadd.f32 0.0, %v212
    %214 = vdwg.mxu0
    %vm215 = vcmp.eq.s32.totalorder %v172, 0
    %vm216 = vcmp.eq.s32.totalorder %v173, 0
    %vm217 = vcmp.eq.s32.totalorder %v174, 0
    %v218 = vsel %vm215, 1, 0
    %v219 = vsel %vm216, 1, 0
    %v220 = vsel %vm217, 1, 0
    %v221 = vcvt.s32.f32 %v218
    %v222 = vcvt.s32.f32 %v219
    %v223 = vcvt.s32.f32 %v220
    %225 = vset.pattern.permute.xlu0 0
    %226 = vperm.xlu0 %225, %v221
    %v227 = vpop.permute.xlu0 %226
    %230 = vset.pattern.permute.xlu0 0
    %231 = vperm.xlu0 %230, %v222
    %v232 = vpop.permute.xlu0 %231
    %235 = vset.pattern.permute.xlu0 0
    %236 = vperm.xlu0 %235, %v223
    %v237 = vpop.permute.xlu0 %236
    %v239 = vmul.f32 %v227, %v207
    %v240 = vmul.f32 %v232, %v210
    %v241 = vmul.f32 %v237, %v213
    %v242 = vadd.f32 %v239, 0.0
    %v243 = vadd.f32 %v240, 0.0
    %v244 = vadd.f32 %v241, 0.0
    %s245 = scalar_lea.vmem [#allocation8], 32
    %v246 = vld [vmem:[%s245] sm:$0xff]
    %v247 = vld [vmem:[%s245 + $0x8] sm:$0xff]
    %v248 = vld [vmem:[%s245 + $0x10] sm:$0xff]
    %v249 = vld [vmem:[%s245 + $0x18] sm:$0xff]
    %250 = vmatpush.msra.mxu0 0.0
    %251 = vmatpush.msra.mxu0 0.0
    %252 = vmatpush.msra.mxu0 0.0
    %253 = vmatpush.msra.mxu0 0.0
    %254 = vmatpush.msra.mxu0 0.0
    %255 = vmatpush.msra.mxu0 0.0
    %256 = vmatpush.msra.mxu0 0.0
    %257 = vmatpush.msra.mxu0 0.0
    %258 = vmatpush.msra.mxu0 0.0
    %259 = vmatpush.msra.mxu0 0.0
    %260 = vmatpush.msra.mxu0 0.0
    %261 = vmatpush.msra.mxu0 0.0
    %262 = vmatpush.msra.mxu0 %v249
    %263 = vmatpush.msra.mxu0 %v248
    %264 = vmatpush.msra.mxu0 %v247
    %265 = vmatpush.msra.mxu0 %v246
    %266 = vmatmul.f32.gmra.mxu0 %v181
    %v267 = vpop.f32.mrf.mxu0
    %v268 = vadd.f32 0.0, %v267
    %269 = vmatmul.f32.gmra.mxu0 %v184
    %v270 = vpop.f32.mrf.mxu0
    %v271 = vadd.f32 0.0, %v270
    %272 = vmatmul.f32.gmra.mxu0 %v187
    %v273 = vpop.f32.mrf.mxu0
    %v274 = vadd.f32 0.0, %v273
    %275 = vdwg.mxu0
    %vm276 = vcmp.eq.s32.totalorder %v172, 1
    %vm277 = vcmp.eq.s32.totalorder %v173, 1
    %vm278 = vcmp.eq.s32.totalorder %v174, 1
    %v279 = vsel %vm276, 1, 0
    %v280 = vsel %vm277, 1, 0
    %v281 = vsel %vm278, 1, 0
    %v282 = vcvt.s32.f32 %v279
    %v283 = vcvt.s32.f32 %v280
    %v284 = vcvt.s32.f32 %v281
    %286 = vset.pattern.permute.xlu0 0
    %287 = vperm.xlu0 %286, %v282
    %v288 = vpop.permute.xlu0 %287
    %291 = vset.pattern.permute.xlu0 0
    %292 = vperm.xlu0 %291, %v283
    %v293 = vpop.permute.xlu0 %292
    %296 = vset.pattern.permute.xlu0 0
    %297 = vperm.xlu0 %296, %v284
    %v298 = vpop.permute.xlu0 %297
    %v300 = vmul.f32 %v288, %v268
    %v301 = vmul.f32 %v293, %v271
    %v302 = vmul.f32 %v298, %v274
    %v303 = vadd.f32 %v242, %v300
    %v304 = vadd.f32 %v243, %v301
    %v305 = vadd.f32 %v244, %v302
    %s306 = scalar_lea.vmem [#allocation8], 64
    %v307 = vld [vmem:[%s306] sm:$0xff]
    %v308 = vld [vmem:[%s306 + $0x8] sm:$0xff]
    %v309 = vld [vmem:[%s306 + $0x10] sm:$0xff]
    %v310 = vld [vmem:[%s306 + $0x18] sm:$0xff]
    %311 = vmatpush.msra.mxu0 0.0
    %312 = vmatpush.msra.mxu0 0.0
    %313 = vmatpush.msra.mxu0 0.0
    %314 = vmatpush.msra.mxu0 0.0
    %315 = vmatpush.msra.mxu0 0.0
    %316 = vmatpush.msra.mxu0 0.0
    %317 = vmatpush.msra.mxu0 0.0
    %318 = vmatpush.msra.mxu0 0.0
    %319 = vmatpush.msra.mxu0 0.0
    %320 = vmatpush.msra.mxu0 0.0
    %321 = vmatpush.msra.mxu0 0.0
    %322 = vmatpush.msra.mxu0 0.0
    %323 = vmatpush.msra.mxu0 %v310
    %324 = vmatpush.msra.mxu0 %v309
    %325 = vmatpush.msra.mxu0 %v308
    %326 = vmatpush.msra.mxu0 %v307
    %327 = vmatmul.f32.gmra.mxu0 %v181
    %v328 = vpop.f32.mrf.mxu0
    %v329 = vadd.f32 0.0, %v328
    %330 = vmatmul.f32.gmra.mxu0 %v184
    %v331 = vpop.f32.mrf.mxu0
    %v332 = vadd.f32 0.0, %v331
    %333 = vmatmul.f32.gmra.mxu0 %v187
    %v334 = vpop.f32.mrf.mxu0
    %v335 = vadd.f32 0.0, %v334
    %336 = vdwg.mxu0
    %vm337 = vcmp.eq.s32.totalorder %v172, 2
    %vm338 = vcmp.eq.s32.totalorder %v173, 2
    %vm339 = vcmp.eq.s32.totalorder %v174, 2
    %v340 = vsel %vm337, 1, 0
    %v341 = vsel %vm338, 1, 0
    %v342 = vsel %vm339, 1, 0
    %v343 = vcvt.s32.f32 %v340
    %v344 = vcvt.s32.f32 %v341
    %v345 = vcvt.s32.f32 %v342
    %347 = vset.pattern.permute.xlu0 0
    %348 = vperm.xlu0 %347, %v343
    %v349 = vpop.permute.xlu0 %348
    %352 = vset.pattern.permute.xlu0 0
    %353 = vperm.xlu0 %352, %v344
    %v354 = vpop.permute.xlu0 %353
    %357 = vset.pattern.permute.xlu0 0
    %358 = vperm.xlu0 %357, %v345
    %v359 = vpop.permute.xlu0 %358
    %v361 = vmul.f32 %v349, %v329
    %v362 = vmul.f32 %v354, %v332
    %v363 = vmul.f32 %v359, %v335
    %v364 = vadd.f32 %v303, %v361
    %v365 = vadd.f32 %v304, %v362
    %v366 = vadd.f32 %v305, %v363
    %s367 = scalar_lea.vmem [#allocation8], 96
    %v368 = vld [vmem:[%s367] sm:$0xff]
    %v369 = vld [vmem:[%s367 + $0x8] sm:$0xff]
    %v370 = vld [vmem:[%s367 + $0x10] sm:$0xff]
    %v371 = vld [vmem:[%s367 + $0x18] sm:$0xff]
    %372 = vmatpush.msra.mxu0 0.0
    %373 = vmatpush.msra.mxu0 0.0
    %374 = vmatpush.msra.mxu0 0.0
    %375 = vmatpush.msra.mxu0 0.0
    %376 = vmatpush.msra.mxu0 0.0
    %377 = vmatpush.msra.mxu0 0.0
    %378 = vmatpush.msra.mxu0 0.0
    %379 = vmatpush.msra.mxu0 0.0
    %380 = vmatpush.msra.mxu0 0.0
    %381 = vmatpush.msra.mxu0 0.0
    %382 = vmatpush.msra.mxu0 0.0
    %383 = vmatpush.msra.mxu0 0.0
    %384 = vmatpush.msra.mxu0 %v371
    %385 = vmatpush.msra.mxu0 %v370
    %386 = vmatpush.msra.mxu0 %v369
    %387 = vmatpush.msra.mxu0 %v368
    %388 = vmatmul.f32.gmra.mxu0 %v181
    %v389 = vpop.f32.mrf.mxu0
    %v390 = vadd.f32 0.0, %v389
    %391 = vmatmul.f32.gmra.mxu0 %v184
    %v392 = vpop.f32.mrf.mxu0
    %v393 = vadd.f32 0.0, %v392
    %394 = vmatmul.f32.gmra.mxu0 %v187
    %v395 = vpop.f32.mrf.mxu0
    %v396 = vadd.f32 0.0, %v395
    %397 = vdwg.mxu0
    %vm398 = vcmp.eq.s32.totalorder %v172, 3
    %vm399 = vcmp.eq.s32.totalorder %v173, 3
    %vm400 = vcmp.eq.s32.totalorder %v174, 3
    %v401 = vsel %vm398, 1, 0
    %v402 = vsel %vm399, 1, 0
    %v403 = vsel %vm400, 1, 0
    %v404 = vcvt.s32.f32 %v401
    %v405 = vcvt.s32.f32 %v402
    %v406 = vcvt.s32.f32 %v403
    %408 = vset.pattern.permute.xlu0 0
    %409 = vperm.xlu0 %408, %v404
    %v410 = vpop.permute.xlu0 %409
    %413 = vset.pattern.permute.xlu0 0
    %414 = vperm.xlu0 %413, %v405
    %v415 = vpop.permute.xlu0 %414
    %418 = vset.pattern.permute.xlu0 0
    %419 = vperm.xlu0 %418, %v406
    %v420 = vpop.permute.xlu0 %419
    %v422 = vmul.f32 %v410, %v390
    %v423 = vmul.f32 %v415, %v393
    %v424 = vmul.f32 %v420, %v396
    %v425 = vadd.f32 %v364, %v422
    %v426 = vadd.f32 %v365, %v423
    %v427 = vadd.f32 %v366, %v424
    %v428 = vlaneseq
    %v429 = vshrl.u32 %v428, 7
    %v430 = vadd.s32 %v429, 8
    %v431 = vld [vmem:[%s3] sm:$0x1]
    %v432 = vperm.slane %v431, 0
    %vm433 = vcmp.eq.s32.totalorder %v429, %v432
    %vm434 = vcmp.eq.s32.totalorder %v430, %v432
    %v435 = vsel %vm433, 1, 0
    %v436 = vsel %vm434, 1, 0
    %v437 = vcvt.s32.f32 %v435
    %v438 = vcvt.s32.f32 %v436
    %vm439 = vcmask 195584
    %v441 = vsel %vm439, %v437, 0
    %v444 = vsel %vm439, %v438, 0
    %446 = vmatpush.msra.mxu0 0.0
    %447 = vmatpush.msra.mxu0 0.0
    %448 = vmatpush.msra.mxu0 0.0
    %449 = vmatpush.msra.mxu0 0.0
    %450 = vmatpush.msra.mxu0 0.0
    %451 = vmatpush.msra.mxu0 0.0
    %452 = vmatpush.msra.mxu0 0.0
    %453 = vmatpush.msra.mxu0 0.0
    %454 = vmatpush.msra.mxu0 0.0
    %455 = vmatpush.msra.mxu0 0.0
    %456 = vmatpush.msra.mxu0 0.0
    %457 = vmatpush.msra.mxu0 0.0
    %458 = vmatpush.msra.mxu0 0.0
    %459 = vmatpush.msra.mxu0 %v427
    %460 = vmatpush.msra.mxu0 %v426
    %461 = vmatpush.msra.mxu0 %v425
    %462 = vmatmul.f32.gmra.mxu0 %v441
    %v463 = vpop.f32.mrf.mxu0
    %v464 = vadd.f32 0.0, %v463
    %465 = vmatmul.f32.gmra.mxu0 %v444
    %v466 = vpop.f32.mrf.mxu0
    %v467 = vadd.f32 0.0, %v466
    %468 = vdwg.mxu0
    %v469 = vld [vmem:[%s4] sm:$0xff]
    %v470 = vld [vmem:[%s4 + $0x8] sm:$0xff]
    %472 = vset.pattern.permute.xlu0 0
    %473 = vperm.xlu0 %472, %v469
    %v474 = vpop.permute.xlu0 %473
    %477 = vset.pattern.permute.xlu0 0
    %478 = vperm.xlu0 %477, %v470
    %v479 = vpop.permute.xlu0 %478
    %v481 = vmul.f32 %v464, %v474
    %v482 = vmul.f32 %v467, %v479
    %v483 = vld [vmem:[#allocation7] sm:$0xff]
    %v484 = vld [vmem:[#allocation7 + $0x8] sm:$0xff]
    %v485 = vld [vmem:[%s6] sm:$0xff]
    %v486 = vld [vmem:[%s6 + $0x8] sm:$0xff]
    %v487 = vld [vmem:[%s6 + $0x10] sm:$0xff]
    %v488 = vld [vmem:[%s6 + $0x18] sm:$0xff]
    %v490 = vsel %vm179, %v483, 0
    %v493 = vsel %vm179, %v484, 0
    %495 = vmatpush.msra.mxu0 0.0
    %496 = vmatpush.msra.mxu0 0.0
    %497 = vmatpush.msra.mxu0 0.0
    %498 = vmatpush.msra.mxu0 0.0
    %499 = vmatpush.msra.mxu0 0.0
    %500 = vmatpush.msra.mxu0 0.0
    %501 = vmatpush.msra.mxu0 0.0
    %502 = vmatpush.msra.mxu0 0.0
    %503 = vmatpush.msra.mxu0 0.0
    %504 = vmatpush.msra.mxu0 0.0
    %505 = vmatpush.msra.mxu0 0.0
    %506 = vmatpush.msra.mxu0 0.0
    %507 = vmatpush.msra.mxu0 %v488
    %508 = vmatpush.msra.mxu0 %v487
    %509 = vmatpush.msra.mxu0 %v486
    %510 = vmatpush.msra.mxu0 %v485
    %511 = vmatmul.f32.gmra.mxu0 %v490
    %v512 = vpop.f32.mrf.mxu0
    %v513 = vadd.f32 0.0, %v512
    %514 = vmatmul.f32.gmra.mxu0 %v493
    %v515 = vpop.f32.mrf.mxu0
    %v516 = vadd.f32 0.0, %v515
    %517 = vdwg.mxu0
    %v518 = vadd.f32 %v481, %v513
    %v519 = vadd.f32 %v482, %v516
    %v520 = vtanh.pop %v518
    %v521 = vtanh.pop %v519
    %522 = vst [vmem:[#allocation10] sm:$0xff] %v520
    %523 = vst [vmem:[#allocation10 + $0x8] sm:$0xff] %v521
    // Predicated region
    $region42: #{tpu_custom_call.1} parent=1 // pred_check
      _
    $region43: #{tpu_custom_call.1} parent=1 // pred_check_branch
      %525 = sbr.rel (0) target = $region45
    $region44: #{tpu_custom_call.1} parent=1 // pred_region
      %527 = vsyncadd [#allocation5], 0
      %s528 = sshll.u32 [#allocation10], 4
      %s529 = int_to_ptr.vmem [resolvable:$true] %s528
      %s530 = sshll.u32 %s7, 4
      %s531 = int_to_ptr.hbm [resolvable:$true] %s530
      %536 = dma.vmem_to_hbm [thread:$0]  %s529, 256, %s531, [#allocation5], 128, 128, 8
    $region45: #{tpu_custom_call.1} parent=1 // pred_fallthru
      _
    // Predicated region
    $region46: #{tpu_custom_call.1} parent=1 // pred_check
      _
    $region47: #{tpu_custom_call.1} parent=1 // pred_check_branch
      %538 = sbr.rel (0) target = $region49
    $region48: #{tpu_custom_call.1} parent=1 // pred_region
      %540 = dma.done [#allocation5], 256
    $region49: #{tpu_custom_call.1} parent=1 // pred_fallthru
      _
    %541 = vsyncpa [#allocation4], 1
    %542 = vsyncpa [#allocation9], 1
    %543 = vsyncpa [#allocation5], 1
    %544 = vsyncpa [#allocation6], 1

</llo_original>
